<compile_context>
chip_gen: v5e
topology: v5e:2x2
jax: 0.10.0
libtpu: 0.0.40
codegen_flags: <defaults>
</compile_context>

<pallas_src>
import jax
import jax.numpy as jnp
from jax.experimental import pallas as pl
from jax.experimental.pallas import tpu as pltpu


def _round_up(n, m):
    return ((n + m - 1) // m) * m


def ann2d_kernel(x_ref, w1_ref, b1_ref, w2_ref, b2_ref, w3_ref, b3_ref, o_ref):
    # fc1 + ReLU  (BN1 is folded into fc2's weights/bias in the wrapper).
    h1 = jnp.dot(x_ref[...], w1_ref[...], preferred_element_type=jnp.float32)
    h1 = jnp.maximum(h1 + b1_ref[...], 0.0)

    # fc2 (BN1 folded in) + ReLU; dropout is identity in eval mode.
    h2 = jnp.dot(h1.astype(w2_ref.dtype), w2_ref[...],
                 preferred_element_type=jnp.float32)
    h2 = jnp.maximum(h2 + b2_ref[...], 0.0)

    # fc3 (BN2 folded in); output lane-padded to a multiple of 128.
    o_ref[...] = (jnp.dot(h2.astype(w3_ref.dtype), w3_ref[...],
                          preferred_element_type=jnp.float32) + b3_ref[...])


def ann2d_forward(x, params, *, block_b=1024, compute_dtype=jnp.float32):
    """x: [B, 1, input_dim] float32 (PyTorch forward signature)."""
    x2d = jnp.squeeze(x, axis=1).astype(jnp.float32)          # squeeze(dim=1)
    B, d_in = x2d.shape

    (w1, b1, g1, be1, m1, v1,
     w2, b2, g2, be2, m2, v2,
     w3, b3) = params
    eps = 1e-5

    # --- glue: fold eval-mode BatchNorm (running stats) into scale/shift, then
    # fold that scale/shift into the NEXT Linear layer (BN sits after ReLU, so
    # folding into layer k+1 is exact).
    s1 = g1 / jnp.sqrt(v1 + eps)
    t1 = be1 - m1 * s1
    s2 = g2 / jnp.sqrt(v2 + eps)
    t2 = be2 - m2 * s2

    w1t = w1.T                                  # [d_in, l1]
    w2t = s1[:, None] * w2.T                    # [l1, l2]   (BN1 folded)
    b2f = b2 + t1 @ w2.T                        # [l2]
    w3t = s2[:, None] * w3.T                    # [l2, out]  (BN2 folded)
    b3f = b3 + t2 @ w3.T                        # [out]

    # --- lane-dense output: pad output features to a multiple of 128.
    out_dim = w3.shape[0]
    out_pad = _round_up(out_dim, 128)
    w3t = jnp.pad(w3t, ((0, 0), (0, out_pad - out_dim)))
    b3f = jnp.pad(b3f, ((0, out_pad - out_dim),))

    # --- batch tiling: pad B so every grid block is full (block_b x ...).
    block_b = min(block_b, _round_up(B, 8))
    b_pad = _round_up(B, block_b)
    if b_pad != B:
        x2d = jnp.pad(x2d, ((0, b_pad - B), (0, 0)))
    grid = (b_pad // block_b,)

    cdt = compute_dtype
    args = (
        x2d.astype(cdt),                                        # streamed
        w1t.astype(cdt), b1.astype(jnp.float32)[None, :],       # resident
        w2t.astype(cdt), b2f.astype(jnp.float32)[None, :],      # resident
        w3t.astype(cdt), b3f.astype(jnp.float32)[None, :],      # resident
    )

    def const_spec(a):
        # Full-array block with a constant index_map -> stays VMEM-resident
        # across all grid steps (no re-DMA).
        return pl.BlockSpec(a.shape, lambda i: (0, 0))

    out = pl.pallas_call(
        ann2d_kernel,
        out_shape=jax.ShapeDtypeStruct((b_pad, out_pad), jnp.float32),
        grid=grid,
        in_specs=[
            pl.BlockSpec((block_b, d_in), lambda i: (i, 0)),    # x
            const_spec(args[1]), const_spec(args[2]),
            const_spec(args[3]), const_spec(args[4]),
            const_spec(args[5]), const_spec(args[6]),
        ],
        out_specs=pl.BlockSpec((block_b, out_pad), lambda i: (i, 0)),
        compiler_params=pltpu.CompilerParams(
            dimension_semantics=("parallel",),                  # megacore on v7x
        ),
    )(*args)

    return out[:B, :out_dim]


def init_params(key, input_dim, layer1=32, layer2=48, output_dim=2):
    """Deterministic synthetic parameters (shapes match nn.Module.__init__)."""
    ks = jax.random.split(key, 8)

    def lin(kw, kb, fan_in, fan_out):
        bound = 1.0 / jnp.sqrt(fan_in)
        w = jax.random.uniform(kw, (fan_out, fan_in), jnp.float32, -bound, bound)
        b = jax.random.uniform(kb, (fan_out,), jnp.float32, -bound, bound)
        return w, b

    w1, b1 = lin(ks[0], ks[1], input_dim, layer1)
    w2, b2 = lin(ks[2], ks[3], layer1, layer2)
    w3, b3 = lin(ks[4], ks[5], layer2, output_dim)

    # BatchNorm1d params: non-trivial but deterministic running stats.
    g1 = 1.0 + 0.1 * jax.random.normal(ks[6], (layer1,), jnp.float32)
    be1 = 0.05 * jnp.arange(layer1, dtype=jnp.float32)
    m1 = 0.01 * jnp.arange(layer1, dtype=jnp.float32)
    v1 = jnp.ones((layer1,), jnp.float32) * 0.9

    g2 = 1.0 + 0.1 * jax.random.normal(ks[7], (layer2,), jnp.float32)
    be2 = -0.02 * jnp.arange(layer2, dtype=jnp.float32)
    m2 = 0.005 * jnp.arange(layer2, dtype=jnp.float32)
    v2 = jnp.ones((layer2,), jnp.float32) * 1.1

    return (w1, b1, g1, be1, m1, v1,
            w2, b2, g2, be2, m2, v2,
            w3, b3)


def reference_forward(x, params):
    """Pure-JAX reference of the eval-mode PyTorch forward."""
    (w1, b1, g1, be1, m1, v1,
     w2, b2, g2, be2, m2, v2,
     w3, b3) = params
    eps = 1e-5
    h = jnp.squeeze(x, axis=1)
    h = jnp.maximum(h @ w1.T + b1, 0.0)
    h = (h - m1) / jnp.sqrt(v1 + eps) * g1 + be1
    h = jnp.maximum(h @ w2.T + b2, 0.0)            # dropout = identity (eval)
    h = (h - m2) / jnp.sqrt(v2 + eps) * g2 + be2
    return h @ w3.T + b3


if __name__ == "__main__":
    # TODO(synk): training-mode BatchNorm (batch statistics) and active Dropout
    # are not implemented; the kernel reproduces eval-mode forward only.
    INPUT_DIM = 16
    key = jax.random.PRNGKey(0)
    kx, kp = jax.random.split(key)
    params = init_params(kp, INPUT_DIM)

    # Small-shape f32 check (tight tolerance vs pure-JAX reference).
    B = 8
    x = jax.random.normal(kx, (B, 1, INPUT_DIM), jnp.float32)
    out = jax.block_until_ready(ann2d_forward(x, params))
    ref = reference_forward(x, params)
    assert out.shape == (B, 2), out.shape
    assert jnp.allclose(out, ref, atol=1e-4, rtol=1e-4)

    # Multi-block grid + batch-padding path (B not a multiple of the block).
    B2 = 300
    x2 = jax.random.normal(jax.random.PRNGKey(1), (B2, 1, INPUT_DIM), jnp.float32)
    out2 = jax.block_until_ready(ann2d_forward(x2, params, block_b=128))
    ref2 = reference_forward(x2, params)
    assert out2.shape == (B2, 2), out2.shape
    assert jnp.allclose(out2, ref2, atol=1e-4, rtol=1e-4)

    # bf16 compute path (halves HBM traffic on v6e/v7x); loose tolerance.
    out_bf = jax.block_until_ready(
        ann2d_forward(x2, params, block_b=128, compute_dtype=jnp.bfloat16))
    assert jnp.allclose(out_bf, ref2, atol=0.25, rtol=0.1)

    print("KERNEL_OK")
</pallas_src>

<mosaic_0001>
module attributes {stable_mosaic.version = 11 : i64} {
  func.func @ann2d_kernel(%arg0: i32, %arg1: memref<8x16xf32, #tpu.memory_space<vmem>>, %arg2: memref<16x32xf32, #tpu.memory_space<vmem>>, %arg3: memref<1x32xf32, #tpu.memory_space<vmem>>, %arg4: memref<32x48xf32, #tpu.memory_space<vmem>>, %arg5: memref<1x48xf32, #tpu.memory_space<vmem>>, %arg6: memref<48x128xf32, #tpu.memory_space<vmem>>, %arg7: memref<1x128xf32, #tpu.memory_space<vmem>>, %arg8: memref<8x128xf32, #tpu.memory_space<vmem>>) attributes {dimension_semantics = [#tpu.dimension_semantics<parallel>], iteration_bounds = array<i64: 1>, scalar_prefetch = 0 : i64, scratch_operands = 0 : i64, tpu.core_type = #tpu.core_type<tc>, window_params = [{transform_indices = @transform_0, window_bounds = array<i64: 8, 16>}, {pipeline_mode = #tpu.pipeline_mode<synchronous>, transform_indices = @transform_1, window_bounds = array<i64: 16, 32>}, {pipeline_mode = #tpu.pipeline_mode<synchronous>, transform_indices = @transform_2, window_bounds = array<i64: 1, 32>}, {pipeline_mode = #tpu.pipeline_mode<synchronous>, transform_indices = @transform_3, window_bounds = array<i64: 32, 48>}, {pipeline_mode = #tpu.pipeline_mode<synchronous>, transform_indices = @transform_4, window_bounds = array<i64: 1, 48>}, {pipeline_mode = #tpu.pipeline_mode<synchronous>, transform_indices = @transform_5, window_bounds = array<i64: 48, 128>}, {pipeline_mode = #tpu.pipeline_mode<synchronous>, transform_indices = @transform_6, window_bounds = array<i64: 1, 128>}, {transform_indices = @transform_7, window_bounds = array<i64: 8, 128>}]} {
    %c0 = arith.constant 0 : index
    %c0_0 = arith.constant 0 : index
    %0 = vector.load %arg1[%c0, %c0_0] : memref<8x16xf32, #tpu.memory_space<vmem>>, vector<8x16xf32>
    %c0_1 = arith.constant 0 : index
    %c0_2 = arith.constant 0 : index
    %1 = vector.load %arg2[%c0_1, %c0_2] : memref<16x32xf32, #tpu.memory_space<vmem>>, vector<16x32xf32>
    %cst = arith.constant dense<0.000000e+00> : vector<8x32xf32>
    %2 = tpu.matmul %0, %1, %cst {dimension_numbers = #tpu.dot_dimension_numbers<[1], [0], [0], [1], [0, 0, 1, 1], [], []>} : vector<8x16xf32>, vector<16x32xf32>, vector<8x32xf32> -> vector<8x32xf32>
    %c0_3 = arith.constant 0 : index
    %c0_4 = arith.constant 0 : index
    %3 = vector.load %arg3[%c0_3, %c0_4] : memref<1x32xf32, #tpu.memory_space<vmem>>, vector<1x32xf32>
    %4 = vector.broadcast %3 : vector<1x32xf32> to vector<8x32xf32>
    %5 = arith.addf %2, %4 : vector<8x32xf32>
    %cst_5 = arith.constant 0.000000e+00 : f32
    %6 = vector.broadcast %cst_5 : f32 to vector<8x32xf32>
    %7 = arith.maximumf %5, %6 : vector<8x32xf32>
    %c0_6 = arith.constant 0 : index
    %c0_7 = arith.constant 0 : index
    %8 = vector.load %arg4[%c0_6, %c0_7] : memref<32x48xf32, #tpu.memory_space<vmem>>, vector<32x48xf32>
    %cst_8 = arith.constant dense<0.000000e+00> : vector<8x48xf32>
    %9 = tpu.matmul %7, %8, %cst_8 {dimension_numbers = #tpu.dot_dimension_numbers<[1], [0], [0], [1], [0, 0, 1, 1], [], []>} : vector<8x32xf32>, vector<32x48xf32>, vector<8x48xf32> -> vector<8x48xf32>
    %c0_9 = arith.constant 0 : index
    %c0_10 = arith.constant 0 : index
    %10 = vector.load %arg5[%c0_9, %c0_10] : memref<1x48xf32, #tpu.memory_space<vmem>>, vector<1x48xf32>
    %11 = vector.broadcast %10 : vector<1x48xf32> to vector<8x48xf32>
    %12 = arith.addf %9, %11 : vector<8x48xf32>
    %cst_11 = arith.constant 0.000000e+00 : f32
    %13 = vector.broadcast %cst_11 : f32 to vector<8x48xf32>
    %14 = arith.maximumf %12, %13 : vector<8x48xf32>
    %c0_12 = arith.constant 0 : index
    %c0_13 = arith.constant 0 : index
    %15 = vector.load %arg6[%c0_12, %c0_13] : memref<48x128xf32, #tpu.memory_space<vmem>>, vector<48x128xf32>
    %cst_14 = arith.constant dense<0.000000e+00> : vector<8x128xf32>
    %16 = tpu.matmul %14, %15, %cst_14 {dimension_numbers = #tpu.dot_dimension_numbers<[1], [0], [0], [1], [0, 0, 1, 1], [], []>} : vector<8x48xf32>, vector<48x128xf32>, vector<8x128xf32> -> vector<8x128xf32>
    %c0_15 = arith.constant 0 : index
    %c0_16 = arith.constant 0 : index
    %17 = vector.load %arg7[%c0_15, %c0_16] : memref<1x128xf32, #tpu.memory_space<vmem>>, vector<1x128xf32>
    %18 = vector.broadcast %17 : vector<1x128xf32> to vector<8x128xf32>
    %19 = arith.addf %16, %18 : vector<8x128xf32>
    %c0_17 = arith.constant 0 : index
    %c0_18 = arith.constant 0 : index
    %20 = vector.load %arg8[%c0_17, %c0_18] : memref<8x128xf32, #tpu.memory_space<vmem>>, vector<8x128xf32>
    tpu.vector_store %arg8[%c0_17, %c0_18], %19 {strides = array<i32>} : memref<8x128xf32, #tpu.memory_space<vmem>>, vector<8x128xf32>,
    return
  }
  func.func @transform_0(%arg0: i32) -> (i32, i32) {
    %c0_i32 = arith.constant 0 : i32
    %c0_i32_0 = arith.constant 0 : i32
    return %arg0, %c0_i32 : i32, i32
  }
  func.func @transform_1(%arg0: i32) -> (i32, i32) {
    %c0_i32 = arith.constant 0 : i32
    %c0_i32_0 = arith.constant 0 : i32
    %c0_i32_1 = arith.constant 0 : i32
    return %c0_i32, %c0_i32_0 : i32, i32
  }
  func.func @transform_2(%arg0: i32) -> (i32, i32) {
    %c0_i32 = arith.constant 0 : i32
    %c0_i32_0 = arith.constant 0 : i32
    %c0_i32_1 = arith.constant 0 : i32
    return %c0_i32, %c0_i32_0 : i32, i32
  }
  func.func @transform_3(%arg0: i32) -> (i32, i32) {
    %c0_i32 = arith.constant 0 : i32
    %c0_i32_0 = arith.constant 0 : i32
    %c0_i32_1 = arith.constant 0 : i32
    return %c0_i32, %c0_i32_0 : i32, i32
  }
  func.func @transform_4(%arg0: i32) -> (i32, i32) {
    %c0_i32 = arith.constant 0 : i32
    %c0_i32_0 = arith.constant 0 : i32
    %c0_i32_1 = arith.constant 0 : i32
    return %c0_i32, %c0_i32_0 : i32, i32
  }
  func.func @transform_5(%arg0: i32) -> (i32, i32) {
    %c0_i32 = arith.constant 0 : i32
    %c0_i32_0 = arith.constant 0 : i32
    %c0_i32_1 = arith.constant 0 : i32
    return %c0_i32, %c0_i32_0 : i32, i32
  }
  func.func @transform_6(%arg0: i32) -> (i32, i32) {
    %c0_i32 = arith.constant 0 : i32
    %c0_i32_0 = arith.constant 0 : i32
    %c0_i32_1 = arith.constant 0 : i32
    return %c0_i32, %c0_i32_0 : i32, i32
  }
  func.func @transform_7(%arg0: i32) -> (i32, i32) {
    %c0_i32 = arith.constant 0 : i32
    %c0_i32_0 = arith.constant 0 : i32
    return %arg0, %c0_i32 : i32, i32
  }
}

</mosaic_0001>

<llo_original>
// kernel: tpu_custom_call.1
$region0: #{tpu_custom_call.1}
  #allocation0 [shape = 'u32[]', space=smem, size = 0x4, offset = 0x4, fixed_abs, tag = 'smem constant byte address 0x4 - core index']
  #allocation1 [shape = 'u32[72,128]{1,0:T(1,128)}', space=vmem, size = 0x9000, scoped, tag = 'internal scratch']
  %s0 = inlined_call_operand.hbm [shape: f32[8,16], index: 0, kind: input, shape index: {}]
  %s1 = inlined_call_operand.hbm [shape: f32[16,32], index: 1, kind: input, shape index: {}]
  %s2 = inlined_call_operand.vmem [shape: f32[1,32], index: 2, kind: input, shape index: {}]
  %s3 = inlined_call_operand.hbm [shape: f32[32,48], index: 3, kind: input, shape index: {}]
  %s4 = inlined_call_operand.vmem [shape: f32[1,48], index: 4, kind: input, shape index: {}]
  %s5 = inlined_call_operand.hbm [shape: f32[48,128], index: 5, kind: input, shape index: {}]
  %s6 = inlined_call_operand.vmem [shape: f32[1,128], index: 6, kind: input, shape index: {}]
  %s7 = inlined_call_operand.hbm [shape: f32[8,128], index: 7, kind: output, shape index: {}]
  %s8 = sld [smem:[#allocation0]]
  $region54: #{tpu_custom_call.1} parent=0
    _
  %s10 = ssub.s32 1, %s8
  %s11 = scalar_select 0, %s10, %s8
  $region1: #{tpu_custom_call.1} parent=0
    #allocation2 [shape = 'u8[4096]{0}', space=vmem, size = 0x1000, scoped, tag = 'input window, operand 0, single buffered']
    #allocation3 [shape = 's32[1]{0}', space=sflag, size = 0x4, scoped, tag = 'scoped memory for tpu_custom_call.1']
    #allocation4 [shape = 's32[1]{0}', space=sflag, size = 0x4, scoped, tag = 'scoped memory for tpu_custom_call.1']
    #allocation5 [shape = 'u8[8192]{0}', space=vmem, size = 0x2000, scoped, tag = 'input window, operand 1, single buffered']
    #allocation6 [shape = 's32[1]{0}', space=sflag, size = 0x4, scoped, tag = 'scoped memory for tpu_custom_call.1']
    #allocation7 [shape = 'u8[16384]{0}', space=vmem, size = 0x4000, scoped, tag = 'input window, operand 3, single buffered']
    #allocation8 [shape = 'u8[24576]{0}', space=vmem, size = 0x6000, scoped, tag = 'input window, operand 5, single buffered']
    #allocation9 [shape = 's32[1]{0}', space=sflag, size = 0x4, scoped, tag = 'scoped memory for tpu_custom_call.1']
    #allocation10 [shape = 'u8[4096]{0}', space=vmem, size = 0x1000, scoped, tag = 'output window, operand 0, single buffered']
    %12 = vsyncpa [#allocation3], 0
    %13 = vsyncpa [#allocation6], 0
    %14 = vsyncpa [#allocation9], 0
    %15 = vsyncpa [#allocation4], 0
    // Predicated region
    $region2: #{tpu_custom_call.1} parent=1 // pred_check
      _
    $region3: #{tpu_custom_call.1} parent=1 // pred_check_branch
      %17 = sbr.rel (0) target = $region5
    $region4: #{tpu_custom_call.1} parent=1 // pred_region
      %19 = vsyncadd [#allocation3], 0
      %s21 = sshll.u32 %s0, 4
      %s22 = int_to_ptr.hbm [resolvable:$true] %s21
      %s23 = sshll.u32 [#allocation2], 4
      %s24 = int_to_ptr.vmem [resolvable:$true] %s23
      %26 = dma.hbm_to_vmem [thread:$0]  %s22, 128, %s24, [#allocation3]
    $region5: #{tpu_custom_call.1} parent=1 // pred_fallthru
      _
    // Predicated region
    $region6: #{tpu_custom_call.1} parent=1 // pred_check
      _
    $region7: #{tpu_custom_call.1} parent=1 // pred_check_branch
      %28 = sbr.rel (0) target = $region9
    $region8: #{tpu_custom_call.1} parent=1 // pred_region
      %30 = vsyncadd [#allocation6], 0
      %s31 = sshll.u32 %s1, 4
      %s32 = int_to_ptr.hbm [resolvable:$true] %s31
      %s33 = sshll.u32 [#allocation5], 4
      %s34 = int_to_ptr.vmem [resolvable:$true] %s33
      %39 = dma.hbm_to_vmem [thread:$0]  %s32, 256, %s34, [#allocation6], 128, 128, 8
    $region9: #{tpu_custom_call.1} parent=1 // pred_fallthru
      _
    // Predicated region
    $region10: #{tpu_custom_call.1} parent=1 // pred_check
      _
    $region11: #{tpu_custom_call.1} parent=1 // pred_check_branch
      %41 = sbr.rel (0) target = $region13
    $region12: #{tpu_custom_call.1} parent=1 // pred_region
      _
    $region13: #{tpu_custom_call.1} parent=1 // pred_fallthru
      _
    // Predicated region
    $region14: #{tpu_custom_call.1} parent=1 // pred_check
      _
    $region15: #{tpu_custom_call.1} parent=1 // pred_check_branch
      %43 = sbr.rel (0) target = $region17
    $region16: #{tpu_custom_call.1} parent=1 // pred_region
      %45 = vsyncadd [#allocation6], 0
      %s46 = sshll.u32 %s3, 4
      %s47 = int_to_ptr.hbm [resolvable:$true] %s46
      %s48 = sshll.u32 [#allocation7], 4
      %s49 = int_to_ptr.vmem [resolvable:$true] %s48
      %54 = dma.hbm_to_vmem [thread:$0]  %s47, 512, %s49, [#allocation6], 128, 128, 8
    $region17: #{tpu_custom_call.1} parent=1 // pred_fallthru
      _
    // Predicated region
    $region18: #{tpu_custom_call.1} parent=1 // pred_check
      _
    $region19: #{tpu_custom_call.1} parent=1 // pred_check_branch
      %56 = sbr.rel (0) target = $region21
    $region20: #{tpu_custom_call.1} parent=1 // pred_region
      _
    $region21: #{tpu_custom_call.1} parent=1 // pred_fallthru
      _
    // Predicated region
    $region22: #{tpu_custom_call.1} parent=1 // pred_check
      _
    $region23: #{tpu_custom_call.1} parent=1 // pred_check_branch
      %58 = sbr.rel (0) target = $region25
    $region24: #{tpu_custom_call.1} parent=1 // pred_region
      %60 = vsyncadd [#allocation9], 0
      %s61 = sshll.u32 %s5, 4
      %s62 = int_to_ptr.hbm [resolvable:$true] %s61
      %s63 = sshll.u32 [#allocation8], 4
      %s64 = int_to_ptr.vmem [resolvable:$true] %s63
      %69 = dma.hbm_to_vmem [thread:$0]  %s62, 768, %s64, [#allocation9], 128, 128, 8
    $region25: #{tpu_custom_call.1} parent=1 // pred_fallthru
      _
    // Predicated region
    $region26: #{tpu_custom_call.1} parent=1 // pred_check
      _
    $region27: #{tpu_custom_call.1} parent=1 // pred_check_branch
      %71 = sbr.rel (0) target = $region29
    $region28: #{tpu_custom_call.1} parent=1 // pred_region
      _
    $region29: #{tpu_custom_call.1} parent=1 // pred_fallthru
      _
    // Predicated region
    $region30: #{tpu_custom_call.1} parent=1 // pred_check
      _
    $region31: #{tpu_custom_call.1} parent=1 // pred_check_branch
      %73 = sbr.rel (0) target = $region33
    $region32: #{tpu_custom_call.1} parent=1 // pred_region
      %75 = dma.done [#allocation3], 128
    $region33: #{tpu_custom_call.1} parent=1 // pred_fallthru
      _
    // Predicated region
    $region34: #{tpu_custom_call.1} parent=1 // pred_check
      _
    $region35: #{tpu_custom_call.1} parent=1 // pred_check_branch
      %77 = sbr.rel (0) target = $region37
    $region36: #{tpu_custom_call.1} parent=1 // pred_region
      %79 = dma.done [#allocation6], 256
    $region37: #{tpu_custom_call.1} parent=1 // pred_fallthru
      _
    // Predicated region
    $region38: #{tpu_custom_call.1} parent=1 // pred_check
      _
    $region39: #{tpu_custom_call.1} parent=1 // pred_check_branch
      %81 = sbr.rel (0) target = $region41
    $region40: #{tpu_custom_call.1} parent=1 // pred_region
      %83 = dma.done [#allocation6], 512
    $region41: #{tpu_custom_call.1} parent=1 // pred_fallthru
      _
    // Predicated region
    $region42: #{tpu_custom_call.1} parent=1 // pred_check
      _
    $region43: #{tpu_custom_call.1} parent=1 // pred_check_branch
      %85 = sbr.rel (0) target = $region45
    $region44: #{tpu_custom_call.1} parent=1 // pred_region
      %87 = dma.done [#allocation9], 768
    $region45: #{tpu_custom_call.1} parent=1 // pred_fallthru
      _
    %v88 = vld [vmem:[#allocation2] sm:$0xff]
    %v89 = vld [vmem:[#allocation5] sm:$0xff]
    %v90 = vld [vmem:[#allocation5 + $0x8] sm:$0xff]
    %v91 = vld [vmem:[%s2] sm:$0x1]
    %v93 = vperm.slane %v91, 0
    %vm95 = vcmask 130048
    %v97 = vsel %vm95, %v88, 0
    %99 = vmatpush.msra.mxu0 0.0
    %100 = vmatpush.msra.mxu0 0.0
    %101 = vmatpush.msra.mxu0 0.0
    %102 = vmatpush.msra.mxu0 0.0
    %103 = vmatpush.msra.mxu0 0.0
    %104 = vmatpush.msra.mxu0 0.0
    %105 = vmatpush.msra.mxu0 0.0
    %106 = vmatpush.msra.mxu0 0.0
    %107 = vmatpush.msra.mxu0 0.0
    %108 = vmatpush.msra.mxu0 0.0
    %109 = vmatpush.msra.mxu0 0.0
    %110 = vmatpush.msra.mxu0 0.0
    %111 = vmatpush.msra.mxu0 0.0
    %112 = vmatpush.msra.mxu0 0.0
    %113 = vmatpush.msra.mxu0 %v90
    %114 = vmatpush.msra.mxu0 %v89
    %115 = vmatmul.f32.gmra.mxu0 %v97
    %v116 = vpop.f32.mrf.mxu0
    %v117 = vadd.f32 %v93, %v116
    %118 = vdwg.mxu0
    %v119 = vmax.f32 %v117, 0.0
    %v120 = vld [vmem:[#allocation7] sm:$0xff]
    %v121 = vld [vmem:[#allocation7 + $0x8] sm:$0xff]
    %v122 = vld [vmem:[#allocation7 + $0x10] sm:$0xff]
    %v123 = vld [vmem:[#allocation7 + $0x18] sm:$0xff]
    %v124 = vld [vmem:[%s4] sm:$0x1]
    %v126 = vperm.slane %v124, 0
    %vm128 = vcmask 261120
    %v130 = vsel %vm128, %v119, 0
    %132 = vmatpush.msra.mxu0 0.0
    %133 = vmatpush.msra.mxu0 0.0
    %134 = vmatpush.msra.mxu0 0.0
    %135 = vmatpush.msra.mxu0 0.0
    %136 = vmatpush.msra.mxu0 0.0
    %137 = vmatpush.msra.mxu0 0.0
    %138 = vmatpush.msra.mxu0 0.0
    %139 = vmatpush.msra.mxu0 0.0
    %140 = vmatpush.msra.mxu0 0.0
    %141 = vmatpush.msra.mxu0 0.0
    %142 = vmatpush.msra.mxu0 0.0
    %143 = vmatpush.msra.mxu0 0.0
    %144 = vmatpush.msra.mxu0 %v123
    %145 = vmatpush.msra.mxu0 %v122
    %146 = vmatpush.msra.mxu0 %v121
    %147 = vmatpush.msra.mxu0 %v120
    %148 = vmatmul.f32.gmra.mxu0 %v130
    %v149 = vpop.f32.mrf.mxu0
    %v150 = vadd.f32 %v126, %v149
    %151 = vdwg.mxu0
    %v152 = vmax.f32 %v150, 0.0
    %v153 = vld [vmem:[#allocation8] sm:$0xff]
    %v154 = vld [vmem:[#allocation8 + $0x8] sm:$0xff]
    %v155 = vld [vmem:[#allocation8 + $0x10] sm:$0xff]
    %v156 = vld [vmem:[#allocation8 + $0x18] sm:$0xff]
    %v157 = vld [vmem:[#allocation8 + $0x20] sm:$0xff]
    %v158 = vld [vmem:[#allocation8 + $0x28] sm:$0xff]
    %v159 = vld [vmem:[%s6] sm:$0x1]
    %v161 = vperm.slane %v159, 0
    %vm163 = vcmask 392192
    %v165 = vsel %vm163, %v152, 0
    %167 = vmatpush.msra.mxu0 0.0
    %168 = vmatpush.msra.mxu0 0.0
    %169 = vmatpush.msra.mxu0 0.0
    %170 = vmatpush.msra.mxu0 0.0
    %171 = vmatpush.msra.mxu0 0.0
    %172 = vmatpush.msra.mxu0 0.0
    %173 = vmatpush.msra.mxu0 0.0
    %174 = vmatpush.msra.mxu0 0.0
    %175 = vmatpush.msra.mxu0 0.0
    %176 = vmatpush.msra.mxu0 0.0
    %177 = vmatpush.msra.mxu0 %v158
    %178 = vmatpush.msra.mxu0 %v157
    %179 = vmatpush.msra.mxu0 %v156
    %180 = vmatpush.msra.mxu0 %v155
    %181 = vmatpush.msra.mxu0 %v154
    %182 = vmatpush.msra.mxu0 %v153
    %183 = vmatmul.f32.gmra.mxu0 %v165
    %v184 = vpop.f32.mrf.mxu0
    %v185 = vadd.f32 %v161, %v184
    %186 = vdwg.mxu0
    %187 = vst [vmem:[#allocation10] sm:$0xff] %v185
    // Predicated region
    $region46: #{tpu_custom_call.1} parent=1 // pred_check
      _
    $region47: #{tpu_custom_call.1} parent=1 // pred_check_branch
      %189 = sbr.rel (0) target = $region49
    $region48: #{tpu_custom_call.1} parent=1 // pred_region
      %191 = vsyncadd [#allocation4], 0
      %s193 = sshll.u32 [#allocation10], 4
      %s194 = int_to_ptr.vmem [resolvable:$true] %s193
      %s195 = sshll.u32 %s7, 4
      %s196 = int_to_ptr.hbm [resolvable:$true] %s195
      %198 = dma.vmem_to_hbm [thread:$0]  %s194, 128, %s196, [#allocation4]
    $region49: #{tpu_custom_call.1} parent=1 // pred_fallthru
      _
    // Predicated region
    $region50: #{tpu_custom_call.1} parent=1 // pred_check
      _
    $region51: #{tpu_custom_call.1} parent=1 // pred_check_branch
      %200 = sbr.rel (0) target = $region53
    $region52: #{tpu_custom_call.1} parent=1 // pred_region
      %202 = dma.done [#allocation4], 128
    $region53: #{tpu_custom_call.1} parent=1 // pred_fallthru
      _
    %203 = vsyncpa [#allocation3], 1
    %204 = vsyncpa [#allocation6], 1
    %205 = vsyncpa [#allocation9], 1
    %206 = vsyncpa [#allocation4], 1

</llo_original>
